<compile_context>
chip_gen: v6e
topology: v6e:2x2x1
jax: 0.10.0
libtpu: 0.0.40
codegen_flags: <defaults>
</compile_context>

<pallas_src>
import functools

import jax
import jax.numpy as jnp
from jax.experimental import pallas as pl
from jax.experimental.pallas import tpu as pltpu


def _distill_kl_kernel(y_s_ref, y_t_ref, o_ref, *, inv_t, n_rows, mask_rows):
    """One row-tile: writes this block's un-normalised KL partial sum.

    y_s_ref / y_t_ref: (tm, C) logits tile (class axis on lanes).
    o_ref:             (8, 128) f32 tile holding this block's partial sum.
    """
    tm = y_s_ref.shape[0]

    ys = y_s_ref[...].astype(jnp.float32) * inv_t
    yt = y_t_ref[...].astype(jnp.float32) * inv_t

    if mask_rows:
        # Partial last block: zero the logits of out-of-range rows.  Zeroed
        # rows give identical student/teacher distributions -> exactly zero
        # contribution, and Inf/NaN garbage in the tail VMEM cannot leak in.
        row = pl.program_id(0) * tm + jax.lax.broadcasted_iota(
            jnp.int32, (tm, 1), 0)
        valid = row < n_rows                                     # (tm, 1)
        ys = jnp.where(valid, ys, 0.0)
        yt = jnp.where(valid, yt, 0.0)

    # Student log-softmax: only the per-row log-normaliser is kept live.
    ys_shift = ys - jnp.max(ys, axis=-1, keepdims=True)
    log_z_s = jnp.log(jnp.sum(jnp.exp(ys_shift), axis=-1, keepdims=True))   # (tm,1)

    # Teacher softmax: per-row reciprocal (EUP) + multiply, not a (tm,C) divide.
    yt_shift = yt - jnp.max(yt, axis=-1, keepdims=True)
    exp_t = jnp.exp(yt_shift)
    z_t = jnp.sum(exp_t, axis=-1, keepdims=True)                            # (tm,1)
    p_t = exp_t * pl.reciprocal(z_t, approx=True)
    log_z_t = jnp.log(z_t)

    # p_t * (log p_t - log p_s), fused so no extra (tm, C) log tiles stay live.
    kl = p_t * ((yt_shift - ys_shift) + (log_z_s - log_z_t))

    per_lane = jnp.sum(kl, axis=0, keepdims=True)        # (1, C)  sublane reduce
    total = jnp.sum(per_lane, axis=-1, keepdims=True)    # (1, 1)  lane reduce
    o_ref[...] = jnp.broadcast_to(total, o_ref.shape).astype(o_ref.dtype)


def distill_kl(y_s, y_t, T, *, tm=None):
    """KL distillation loss. y_s, y_t: [batch, num_classes] logits. Returns scalar."""
    assert y_s.shape == y_t.shape and y_s.ndim == 2, "expected 2D logits [N, C]"
    M, C = map(int, y_s.shape)
    itemsize = jnp.dtype(y_s.dtype).itemsize

    # VMEM budget with headroom (v7x: 64 MiB/TC, v5e/v6e: 128 MiB physical).
    try:
        vmem_cap = int(pltpu.get_tpu_info().vmem_capacity_bytes)
    except Exception:  # conservative default if no TPU visible at trace time
        vmem_cap = 64 * 1024 * 1024
    vmem_budget = min(int(vmem_cap * 0.75), 100 * 1024 * 1024)

    # Rough per-row VMEM cost: 2 inputs x 2 pipeline buffers + ~8 f32 temps.
    row_in_bytes = C * itemsize
    row_tmp_bytes = 8 * C * 4
    per_row_bytes = 4 * row_in_bytes + row_tmp_bytes

    if tm is None:
        # Target ~2 MiB per input block: amortises the ~0.35us per-step
        # overhead and keeps the DMA pipeline at the HBM roofline.
        tm = (2 * 1024 * 1024) // max(row_in_bytes, 1)
    tm = int(tm)
    tm = min(tm, max((vmem_budget - (1 << 20)) // per_row_bytes, 8))
    if tm >= M:
        tm = M                      # one full-extent block; no padded rows
    else:
        tm = max((tm // 8) * 8, 8)  # partial blocks must honour the 8-sublane rule

    num_blocks = (M + tm - 1) // tm
    mask_rows = (M % tm) != 0

    kernel = functools.partial(
        _distill_kl_kernel,
        inv_t=1.0 / float(T),
        n_rows=M,
        mask_rows=mask_rows,
    )

    footprint = 4 * tm * row_in_bytes + tm * row_tmp_bytes + 2 * 8 * 128 * 4
    vmem_limit = max(int(footprint) + (8 << 20), 16 << 20)

    cost = pl.CostEstimate(
        flops=12 * M * C,
        transcendentals=2 * M * C + 3 * M,   # 2 exps/elem + per-row log/log/rcp
        bytes_accessed=2 * M * C * itemsize + num_blocks * 8 * 128 * 4,
    )

    partials = pl.pallas_call(
        kernel,
        out_shape=jax.ShapeDtypeStruct((num_blocks * 8, 128), jnp.float32),
        grid=(num_blocks,),
        in_specs=[
            pl.BlockSpec((tm, C), lambda i: (i, 0)),   # student logits tile
            pl.BlockSpec((tm, C), lambda i: (i, 0)),   # teacher logits tile
        ],
        out_specs=pl.BlockSpec((8, 128), lambda i: (i, 0)),   # per-block partial
        compiler_params=pltpu.CompilerParams(
            dimension_semantics=("parallel",),          # megacore-shardable rows
            vmem_limit_bytes=int(vmem_limit),
        ),
        cost_estimate=cost,
    )(y_s, y_t)

    # Tiny epilogue in plain JAX: sum per-block partials, apply the 'mean'
    # reduction (divide by M*C) and the T**2 factor.
    # TODO(synk): for C < 128 the class axis under-fills the 128-lane vreg;
    # packing multiple rows per lane-row would raise VPU/EUP occupancy.
    scale = float(T * T) / float(M * C)
    return jnp.sum(partials[::8, 0]) * scale


def _reference(y_s, y_t, T):
    log_p_s = jax.nn.log_softmax(y_s / T, axis=1)
    p_t = jax.nn.softmax(y_t / T, axis=1)
    return jnp.mean(p_t * (jnp.log(p_t) - log_p_s)) * (T ** 2)


if __name__ == "__main__":
    # Small, module-consistent shapes: batch=20 rows of 32-class logits.
    N, C = 20, 32
    T = 4.0

    key = jax.random.PRNGKey(0)
    ks, kt = jax.random.split(key, 2)
    y_s = jax.random.normal(ks, (N, C), dtype=jnp.float32)
    y_t = jax.random.normal(kt, (N, C), dtype=jnp.float32)

    # Auto-sized tile path: single full block, no masking.
    loss = jax.block_until_ready(distill_kl(y_s, y_t, T))

    # Small-tile path: multiple parallel blocks + masked partial last block.
    loss_multi = jax.block_until_ready(distill_kl(y_s, y_t, T, tm=8))

    ref = _reference(y_s, y_t, T)

    assert loss.shape == ()
    assert jnp.allclose(loss, ref, atol=1e-6, rtol=1e-2), (loss, ref)
    assert jnp.allclose(loss_multi, ref, atol=1e-6, rtol=1e-2), (loss_multi, ref)
    print("KERNEL_OK")
</pallas_src>

<mosaic_0001>
module attributes {stable_mosaic.version = 11 : i64} {
  func.func @_distill_kl_kernel(%arg0: i32, %arg1: memref<20x32xf32, #tpu.memory_space<vmem>>, %arg2: memref<20x32xf32, #tpu.memory_space<vmem>>, %arg3: memref<8x128xf32, #tpu.memory_space<vmem>>) attributes {dimension_semantics = [#tpu.dimension_semantics<parallel>], iteration_bounds = array<i64: 1>, scalar_prefetch = 0 : i64, scratch_operands = 0 : i64, tpu.core_type = #tpu.core_type<tc>, window_params = [{transform_indices = @transform_0, window_bounds = array<i64: 20, 32>}, {transform_indices = @transform_1, window_bounds = array<i64: 20, 32>}, {transform_indices = @transform_2, window_bounds = array<i64: 8, 128>}]} {
    %c0 = arith.constant 0 : index
    %c0_0 = arith.constant 0 : index
    %0 = vector.load %arg1[%c0, %c0_0] : memref<20x32xf32, #tpu.memory_space<vmem>>, vector<20x32xf32>
    %cst = arith.constant 2.500000e-01 : f32
    %1 = vector.broadcast %cst : f32 to vector<20x32xf32>
    %2 = arith.mulf %0, %1 : vector<20x32xf32>
    %c0_1 = arith.constant 0 : index
    %c0_2 = arith.constant 0 : index
    %3 = vector.load %arg2[%c0_1, %c0_2] : memref<20x32xf32, #tpu.memory_space<vmem>>, vector<20x32xf32>
    %cst_3 = arith.constant 2.500000e-01 : f32
    %4 = vector.broadcast %cst_3 : f32 to vector<20x32xf32>
    %5 = arith.mulf %3, %4 : vector<20x32xf32>
    %cst_4 = arith.constant dense<0xFF800000> : vector<20xf32>
    %6 = vector.multi_reduction <maximumf>, %2, %cst_4 [1] : vector<20x32xf32> to vector<20xf32>
    %7 = vector.shape_cast %6 : vector<20xf32> to vector<20x1xf32>
    %8 = vector.broadcast %7 : vector<20x1xf32> to vector<20x32xf32>
    %9 = arith.subf %2, %8 : vector<20x32xf32>
    %10 = math.exp %9 : vector<20x32xf32>
    %cst_5 = arith.constant dense<0.000000e+00> : vector<20xf32>
    %11 = vector.multi_reduction <add>, %10, %cst_5 [1] : vector<20x32xf32> to vector<20xf32>
    %12 = vector.shape_cast %11 : vector<20xf32> to vector<20x1xf32>
    %13 = math.log %12 : vector<20x1xf32>
    %cst_6 = arith.constant dense<0xFF800000> : vector<20xf32>
    %14 = vector.multi_reduction <maximumf>, %5, %cst_6 [1] : vector<20x32xf32> to vector<20xf32>
    %15 = vector.shape_cast %14 : vector<20xf32> to vector<20x1xf32>
    %16 = vector.broadcast %15 : vector<20x1xf32> to vector<20x32xf32>
    %17 = arith.subf %5, %16 : vector<20x32xf32>
    %18 = math.exp %17 : vector<20x32xf32>
    %cst_7 = arith.constant dense<0.000000e+00> : vector<20xf32>
    %19 = vector.multi_reduction <add>, %18, %cst_7 [1] : vector<20x32xf32> to vector<20xf32>
    %20 = vector.shape_cast %19 : vector<20xf32> to vector<20x1xf32>
    %21 = tpu.reciprocal %20 {approx = true} : vector<20x1xf32> -> vector<20x1xf32>
    %22 = vector.broadcast %21 : vector<20x1xf32> to vector<20x32xf32>
    %23 = arith.mulf %18, %22 : vector<20x32xf32>
    %24 = math.log %20 : vector<20x1xf32>
    %25 = arith.subf %17, %9 : vector<20x32xf32>
    %26 = arith.subf %13, %24 : vector<20x1xf32>
    %27 = vector.broadcast %26 : vector<20x1xf32> to vector<20x32xf32>
    %28 = arith.addf %25, %27 : vector<20x32xf32>
    %29 = arith.mulf %23, %28 : vector<20x32xf32>
    %cst_8 = arith.constant dense<0.000000e+00> : vector<32xf32>
    %30 = vector.multi_reduction <add>, %29, %cst_8 [0] : vector<20x32xf32> to vector<32xf32>
    %31 = vector.shape_cast %30 : vector<32xf32> to vector<1x32xf32>
    %cst_9 = arith.constant dense<0.000000e+00> : vector<1xf32>
    %32 = vector.multi_reduction <add>, %31, %cst_9 [1] : vector<1x32xf32> to vector<1xf32>
    %33 = vector.shape_cast %32 : vector<1xf32> to vector<1x1xf32>
    %34 = vector.shape_cast %33 : vector<1x1xf32> to vector<1x1xf32>
    %35 = vector.broadcast %34 : vector<1x1xf32> to vector<8x128xf32>
    %c0_10 = arith.constant 0 : index
    %c0_11 = arith.constant 0 : index
    %36 = vector.load %arg3[%c0_10, %c0_11] : memref<8x128xf32, #tpu.memory_space<vmem>>, vector<8x128xf32>
    tpu.vector_store %arg3[%c0_10, %c0_11], %35 {strides = array<i32>} : memref<8x128xf32, #tpu.memory_space<vmem>>, vector<8x128xf32>,
    return
  }
  func.func @transform_0(%arg0: i32) -> (i32, i32) {
    %c0_i32 = arith.constant 0 : i32
    %c0_i32_0 = arith.constant 0 : i32
    return %arg0, %c0_i32 : i32, i32
  }
  func.func @transform_1(%arg0: i32) -> (i32, i32) {
    %c0_i32 = arith.constant 0 : i32
    %c0_i32_0 = arith.constant 0 : i32
    return %arg0, %c0_i32 : i32, i32
  }
  func.func @transform_2(%arg0: i32) -> (i32, i32) {
    %c0_i32 = arith.constant 0 : i32
    %c0_i32_0 = arith.constant 0 : i32
    return %arg0, %c0_i32 : i32, i32
  }
}

</mosaic_0001>

<llo_original>
// kernel: tpu_custom_call.1
$region0: #{tpu_custom_call.1}
  #allocation0 [shape = 'u32[]', space=smem, size = 0x4, offset = 0x4, fixed_abs, tag = 'smem constant byte address 0x4 - core index']
  #allocation1 [shape = 'u32[144,128]{1,0:T(1,128)}', space=vmem, size = 0x12000, scoped, tag = 'internal scratch']
  %s0 = inlined_call_operand.hbm [shape: f32[20,32], index: 0, kind: input, shape index: {}]
  %s1 = inlined_call_operand.hbm [shape: f32[20,32], index: 1, kind: input, shape index: {}]
  %s2 = inlined_call_operand.hbm [shape: f32[8,128], index: 2, kind: output, shape index: {}]
  %s3 = sld [smem:[#allocation0]]
  $region26: #{tpu_custom_call.1} parent=0
    _
  %s5 = ssub.s32 1, %s3
  %s6 = scalar_select 0, %s5, %s3
  $region1: #{tpu_custom_call.1} parent=0
    #allocation2 [shape = 'u8[12288]{0}', space=vmem, size = 0x3000, scoped, tag = 'input window, operand 0, single buffered']
    #allocation3 [shape = 's32[1]{0}', space=sflag, size = 0x4, scoped, tag = 'scoped memory for tpu_custom_call.1']
    #allocation4 [shape = 's32[1]{0}', space=sflag, size = 0x4, scoped, tag = 'scoped memory for tpu_custom_call.1']
    #allocation5 [shape = 'u8[12288]{0}', space=vmem, size = 0x3000, scoped, tag = 'input window, operand 1, single buffered']
    #allocation6 [shape = 's32[1]{0}', space=sflag, size = 0x4, scoped, tag = 'scoped memory for tpu_custom_call.1']
    #allocation7 [shape = 'u8[4096]{0}', space=vmem, size = 0x1000, scoped, tag = 'output window, operand 0, single buffered']
    %7 = vsyncpa [#allocation3], 0
    %8 = vsyncpa [#allocation6], 0
    %9 = vsyncpa [#allocation4], 0
    // Predicated region
    $region2: #{tpu_custom_call.1} parent=1 // pred_check
      _
    $region3: #{tpu_custom_call.1} parent=1 // pred_check_branch
      %11 = sbr.rel (0) target = $region5
    $region4: #{tpu_custom_call.1} parent=1 // pred_region
      %s13 = ssub.s32 384, 384
      %14 = vsyncadd [#allocation3], %s13
      %s15 = sshll.u32 [#allocation2], 4
      %s16 = int_to_ptr.vmem [resolvable:$true] %s15
      %21 = dma.hbm_to_vmem [thread:$0]  %s0, 384, %s16, [#allocation3], 128, 128, 8
    $region5: #{tpu_custom_call.1} parent=1 // pred_fallthru
      _
    // Predicated region
    $region6: #{tpu_custom_call.1} parent=1 // pred_check
      _
    $region7: #{tpu_custom_call.1} parent=1 // pred_check_branch
      %23 = sbr.rel (0) target = $region9
    $region8: #{tpu_custom_call.1} parent=1 // pred_region
      %s25 = ssub.s32 384, 384
      %26 = vsyncadd [#allocation6], %s25
      %s27 = sshll.u32 [#allocation5], 4
      %s28 = int_to_ptr.vmem [resolvable:$true] %s27
      %33 = dma.hbm_to_vmem [thread:$0]  %s1, 384, %s28, [#allocation6], 128, 128, 8
    $region9: #{tpu_custom_call.1} parent=1 // pred_fallthru
      _
    // Predicated region
    $region10: #{tpu_custom_call.1} parent=1 // pred_check
      _
    $region11: #{tpu_custom_call.1} parent=1 // pred_check_branch
      %35 = sbr.rel (0) target = $region13
    $region12: #{tpu_custom_call.1} parent=1 // pred_region
      %36 = dma.done [#allocation3], 384
    $region13: #{tpu_custom_call.1} parent=1 // pred_fallthru
      _
    // Predicated region
    $region14: #{tpu_custom_call.1} parent=1 // pred_check
      _
    $region15: #{tpu_custom_call.1} parent=1 // pred_check_branch
      %38 = sbr.rel (0) target = $region17
    $region16: #{tpu_custom_call.1} parent=1 // pred_region
      %39 = dma.done [#allocation6], 384
    $region17: #{tpu_custom_call.1} parent=1 // pred_fallthru
      _
    %v40 = vld [vmem:[#allocation2] sm:$0xff]
    %v41 = vld [vmem:[#allocation2 + $0x8] sm:$0xff]
    %v42 = vld [vmem:[#allocation2 + $0x10] sm:$0xf]
    %v43 = vmul.f32 %v40, 0.25
    %v44 = vmul.f32 %v41, 0.25
    %v45 = vmul.f32 %v42, 0.25
    %v46 = vld [vmem:[#allocation5] sm:$0xff]
    %v47 = vld [vmem:[#allocation5 + $0x8] sm:$0xff]
    %v48 = vld [vmem:[#allocation5 + $0x10] sm:$0xf]
    %v49 = vmul.f32 %v46, 0.25
    %v50 = vmul.f32 %v47, 0.25
    %v51 = vmul.f32 %v48, 0.25
    %vm52 = vcmask 261120
    %v53 = vsel %vm52, %v43, -inf
    %54 = vmax.xlane.f32.xlu0 %v53
    %v55 = vpop.xlane.xlu0 %54
    %v56 = vsel %vm52, %v44, -inf
    %57 = vmax.xlane.f32.xlu0 %v56
    %v58 = vpop.xlane.xlu0 %57
    %vm59 = vcmask 257024
    %v60 = vsel %vm59, %v45, -inf
    %61 = vmax.xlane.f32.xlu0 %v60
    %v62 = vpop.xlane.xlu0 %61
    %v63 = vsub.f32 %v43, %v55
    %v64 = vsub.f32 %v44, %v58
    %v65 = vsub.f32 %v45, %v62
    %v66 = vmul.f32 %v63, 1.442695
    %v67 = vpow.pop %v66
    %v68 = vmul.f32 %v64, 1.442695
    %v69 = vpow.pop %v68
    %v70 = vmul.f32 %v65, 1.442695
    %v71 = vpow.pop %v70
    %v72 = vsel %vm52, %v67, 0.0
    %73 = vadd.xlane.f32.xlu0 %v72
    %v74 = vpop.xlane.xlu0 %73
    %v75 = vsel %vm52, %v69, 0.0
    %76 = vadd.xlane.f32.xlu0 %v75
    %v77 = vpop.xlane.xlu0 %76
    %v78 = vsel %vm59, %v71, 0.0
    %79 = vadd.xlane.f32.xlu0 %v78
    %v80 = vpop.xlane.xlu0 %79
    %v81 = vlog2.pop %v74
    %v82 = vmul.f32 %v81, 0.6931472
    %v83 = vlog2.pop %v77
    %v84 = vmul.f32 %v83, 0.6931472
    %v85 = vlog2.pop %v80
    %v86 = vmul.f32 %v85, 0.6931472
    %v87 = vsel %vm52, %v49, -inf
    %88 = vmax.xlane.f32.xlu0 %v87
    %v89 = vpop.xlane.xlu0 %88
    %v90 = vsel %vm52, %v50, -inf
    %91 = vmax.xlane.f32.xlu0 %v90
    %v92 = vpop.xlane.xlu0 %91
    %v93 = vsel %vm59, %v51, -inf
    %94 = vmax.xlane.f32.xlu0 %v93
    %v95 = vpop.xlane.xlu0 %94
    %v96 = vsub.f32 %v49, %v89
    %v97 = vsub.f32 %v50, %v92
    %v98 = vsub.f32 %v51, %v95
    %v99 = vmul.f32 %v96, 1.442695
    %v100 = vpow.pop %v99
    %v101 = vmul.f32 %v97, 1.442695
    %v102 = vpow.pop %v101
    %v103 = vmul.f32 %v98, 1.442695
    %v104 = vpow.pop %v103
    %v105 = vsel %vm52, %v100, 0.0
    %106 = vadd.xlane.f32.xlu0 %v105
    %v107 = vpop.xlane.xlu0 %106
    %v108 = vsel %vm52, %v102, 0.0
    %109 = vadd.xlane.f32.xlu0 %v108
    %v110 = vpop.xlane.xlu0 %109
    %v111 = vsel %vm59, %v104, 0.0
    %112 = vadd.xlane.f32.xlu0 %v111
    %v113 = vpop.xlane.xlu0 %112
    %v114 = vrcp.pop %v107
    %v115 = vrcp.pop %v110
    %v116 = vrcp.pop %v113
    %v117 = vmul.f32 %v100, %v114
    %v118 = vmul.f32 %v102, %v115
    %v119 = vmul.f32 %v104, %v116
    %v120 = vlog2.pop %v107
    %v121 = vmul.f32 %v120, 0.6931472
    %v122 = vlog2.pop %v110
    %v123 = vmul.f32 %v122, 0.6931472
    %v124 = vlog2.pop %v113
    %v125 = vmul.f32 %v124, 0.6931472
    %v126 = vsub.f32 %v96, %v63
    %v127 = vsub.f32 %v97, %v64
    %v128 = vsub.f32 %v98, %v65
    %v129 = vsub.f32 %v82, %v121
    %v130 = vsub.f32 %v84, %v123
    %v131 = vsub.f32 %v86, %v125
    %v132 = vadd.f32 %v126, %v129
    %v133 = vadd.f32 %v127, %v130
    %v134 = vadd.f32 %v128, %v131
    %v135 = vmul.f32 %v117, %v132
    %v136 = vmul.f32 %v118, %v133
    %v137 = vmul.f32 %v119, %v134
    %v138 = vsel %vm52, %v135, 0.0
    %v139 = vsel %vm52, %v136, 0.0
    %v140 = vadd.f32 %v138, %v139
    %v141 = vsel %vm59, %v137, 0.0
    %v142 = vadd.f32 %v140, %v141
    %v143 = vrot.slane %v142, 4
    %v144 = vadd.f32 %v142, %v143
    %v145 = vrot.slane %v144, 2
    %v146 = vadd.f32 %v144, %v145
    %v147 = vrot.slane %v146, 1
    %v148 = vadd.f32 %v146, %v147
    %v149 = vsel %vm52, %v148, 0.0
    %150 = vadd.xlane.f32.xlu0 %v149
    %v151 = vpop.xlane.xlu0 %150
    %152 = vst [vmem:[#allocation7] sm:$0xff] %v151
    // Predicated region
    $region18: #{tpu_custom_call.1} parent=1 // pred_check
      _
    $region19: #{tpu_custom_call.1} parent=1 // pred_check_branch
      %154 = sbr.rel (0) target = $region21
    $region20: #{tpu_custom_call.1} parent=1 // pred_region
      %s156 = ssub.s32 128, 128
      %157 = vsyncadd [#allocation4], %s156
      %s159 = sshll.u32 [#allocation7], 4
      %s160 = int_to_ptr.vmem [resolvable:$true] %s159
      %162 = dma.vmem_to_hbm [thread:$0]  %s160, 128, %s2, [#allocation4]
    $region21: #{tpu_custom_call.1} parent=1 // pred_fallthru
      _
    // Predicated region
    $region22: #{tpu_custom_call.1} parent=1 // pred_check
      _
    $region23: #{tpu_custom_call.1} parent=1 // pred_check_branch
      %164 = sbr.rel (0) target = $region25
    $region24: #{tpu_custom_call.1} parent=1 // pred_region
      %165 = dma.done [#allocation4], 128
    $region25: #{tpu_custom_call.1} parent=1 // pred_fallthru
      _
    %166 = vsyncpa [#allocation3], 1
    %167 = vsyncpa [#allocation6], 1
    %168 = vsyncpa [#allocation4], 1

</llo_original>
